<compile_context>
chip_gen: v6e
topology: v6e:2x2x1
jax: 0.10.0
libtpu: 0.0.40
codegen_flags: <defaults>
</compile_context>

<pallas_src>
import math
import jax
import jax.numpy as jnp
from jax.experimental import pallas as pl
from jax.experimental.pallas import tpu as pltpu

D_IN = 35   # input features
D_H1 = 24
D_H2 = 16
D_H3 = 4
D_OUT = 1


def _round_up(n, m):
    return ((n + m - 1) // m) * m


def _disc_kernel(xt_ref,            # (35, TB)   compute_dtype
                 w1_ref, b1_ref,    # (24, 35),  (24, 1)
                 w2_ref, b2_ref,    # (16, 24),  (16, 1)
                 w3_ref, b3_ref,    # (4, 16),   (4, 1)
                 w4_ref, b4_ref,    # (4, 1),    (1, 1)
                 out_ref):          # (1, TB)    float32
    cdt = w1_ref.dtype  # dot-operand dtype (f32 or bf16); accumulation is f32.
    xt = xt_ref[...]

    # Feature-major: h^T = tanh(W @ x^T + b), activations are (feat, TB).
    h = jnp.tanh(jnp.dot(w1_ref[...], xt,
                         preferred_element_type=jnp.float32) + b1_ref[...])
    h = jnp.tanh(jnp.dot(w2_ref[...], h.astype(cdt),
                         preferred_element_type=jnp.float32) + b2_ref[...])
    h = jnp.tanh(jnp.dot(w3_ref[...], h.astype(cdt),
                         preferred_element_type=jnp.float32) + b3_ref[...])

    # Final 4 -> 1 layer on the VPU: lane-dense broadcast FMA + sublane reduce
    # (a K=4, N=1 matmul would waste an MXU push/pop for nothing).
    z = jnp.sum(w4_ref[...].astype(jnp.float32) * h, axis=0, keepdims=True) \
        + b4_ref[...]
    out_ref[...] = jax.nn.sigmoid(z)


def _linear_params(key, fan_in, fan_out):
    """PyTorch-style Linear init; W stored (out, in) like nn.Linear, b as (out,)."""
    kw, kb = jax.random.split(key)
    bound = 1.0 / math.sqrt(fan_in)
    w = jax.random.uniform(kw, (fan_out, fan_in), jnp.float32, -bound, bound)
    b = jax.random.uniform(kb, (fan_out,), jnp.float32, -bound, bound)
    return w, b


def init_params(key):
    k1, k2, k3, k4 = jax.random.split(key, 4)
    w1, b1 = _linear_params(k1, D_IN, D_H1)   # hidden_layer_1
    w2, b2 = _linear_params(k2, D_H1, D_H2)   # hidden_layer_2
    w3, b3 = _linear_params(k3, D_H2, D_H3)   # hidden_layer_3
    w4, b4 = _linear_params(k4, D_H3, D_OUT)  # hidden_layer_4
    return dict(w1=w1, b1=b1, w2=w2, b2=b2, w3=w3, b3=b3, w4=w4, b4=b4)


def esg_gan_linear_discriminator_35(params, x, *, tile_rows=4096,
                                    compute_dtype=jnp.float32):
    """x: (..., 35). Returns {'x_input': x, 'x_output': (..., 1)} (float32)."""
    lead = x.shape[:-1]
    N = int(math.prod(lead)) if lead else 1
    x2d = x.reshape(N, D_IN).astype(jnp.float32)

    # Batch tile: big (up to tile_rows) but kept to >= 2 grid steps on large
    # batches so v7x's two TensorCores both get work; TB is a multiple of 128
    # so the lane axis of every block is dense.
    TB = min(int(tile_rows), _round_up(max((N + 1) // 2, 1), 128))
    N_pad = _round_up(N, TB)
    grid = (N_pad // TB,)

    # Feature-major input: (35, N_pad), zero-padded in the batch dimension.
    xt = x2d.T                                    # (35, N)
    if N_pad != N:
        xt = jnp.pad(xt, ((0, 0), (0, N_pad - N)))
    xt = xt.astype(compute_dtype)

    w1 = params["w1"].astype(compute_dtype)                      # (24, 35)
    w2 = params["w2"].astype(compute_dtype)                      # (16, 24)
    w3 = params["w3"].astype(compute_dtype)                      # (4, 16)
    w4 = params["w4"].reshape(D_H3, D_OUT).astype(compute_dtype)  # (4, 1) column
    b1 = params["b1"].reshape(D_H1, 1).astype(jnp.float32)
    b2 = params["b2"].reshape(D_H2, 1).astype(jnp.float32)
    b3 = params["b3"].reshape(D_H3, 1).astype(jnp.float32)
    b4 = params["b4"].reshape(1, 1).astype(jnp.float32)

    def _tile_map(i):          # streamed batch tiles
        return (0, i)

    def _const_map(i):         # weights/biases stay VMEM-resident
        return (0, 0)

    weight_specs = [
        pl.BlockSpec((D_H1, D_IN), _const_map), pl.BlockSpec((D_H1, 1), _const_map),
        pl.BlockSpec((D_H2, D_H1), _const_map), pl.BlockSpec((D_H2, 1), _const_map),
        pl.BlockSpec((D_H3, D_H2), _const_map), pl.BlockSpec((D_H3, 1), _const_map),
        pl.BlockSpec((D_H3, D_OUT), _const_map), pl.BlockSpec((1, 1), _const_map),
    ]

    x_itemsize = jnp.dtype(compute_dtype).itemsize
    flops = 2 * N_pad * (D_IN * D_H1 + D_H1 * D_H2 + D_H2 * D_H3 + D_H3 * D_OUT)
    transcendentals = N_pad * (D_H1 + D_H2 + D_H3 + D_OUT)
    bytes_accessed = (x_itemsize * N_pad * D_IN + 4 * N_pad * D_OUT
                      + x_itemsize * (D_IN * D_H1 + D_H1 * D_H2
                                      + D_H2 * D_H3 + D_H3 * D_OUT)
                      + 4 * (D_H1 + D_H2 + D_H3 + D_OUT))

    out_t = pl.pallas_call(
        _disc_kernel,
        out_shape=jax.ShapeDtypeStruct((D_OUT, N_pad), jnp.float32),
        grid=grid,
        in_specs=[pl.BlockSpec((D_IN, TB), _tile_map)] + weight_specs,
        out_specs=pl.BlockSpec((D_OUT, TB), _tile_map),
        compiler_params=pltpu.CompilerParams(
            dimension_semantics=("parallel",),
            vmem_limit_bytes=32 * 1024 * 1024),
        cost_estimate=pl.CostEstimate(
            flops=flops,
            transcendentals=transcendentals,
            bytes_accessed=bytes_accessed),
    )(
        xt,
        w1, b1,
        w2, b2,
        w3, b3,
        w4, b4,
    )

    x_hat = out_t[0, :N].reshape(*lead, D_OUT)
    return {"x_input": x, "x_output": x_hat}


def _reference(params, x):
    """Pure-JAX reference of the same forward (sanity check)."""
    lead = x.shape[:-1]
    N = int(math.prod(lead)) if lead else 1
    h = x.reshape(N, D_IN).astype(jnp.float32)
    h = jnp.tanh(h @ params["w1"].T + params["b1"])
    h = jnp.tanh(h @ params["w2"].T + params["b2"])
    h = jnp.tanh(h @ params["w3"].T + params["b3"])
    z = h @ params["w4"].T + params["b4"]
    return jax.nn.sigmoid(z).reshape(*lead, D_OUT)


if __name__ == "__main__":
    key = jax.random.PRNGKey(0)
    k_param, k_x1, k_x2 = jax.random.split(key, 3)

    params = init_params(k_param)

    # Small batch (single grid step, padded to 128 lanes).
    B = 8
    x = jax.random.normal(k_x1, (B, D_IN), dtype=jnp.float32)
    result = jax.block_until_ready(esg_gan_linear_discriminator_35(params, x))
    ref = _reference(params, x)
    assert result["x_output"].shape == (B, D_OUT)
    assert jnp.allclose(result["x_output"], ref, atol=1e-5, rtol=1e-5)
    assert jnp.allclose(result["x_input"], x)

    # Slightly larger, non-multiple-of-128 batch: exercises padding + a
    # multi-step "parallel" grid.
    B2 = 260
    x2 = jax.random.normal(k_x2, (B2, D_IN), dtype=jnp.float32)
    result2 = jax.block_until_ready(esg_gan_linear_discriminator_35(params, x2))
    ref2 = _reference(params, x2)
    assert result2["x_output"].shape == (B2, D_OUT)
    assert jnp.allclose(result2["x_output"], ref2, atol=1e-5, rtol=1e-5)

    print("KERNEL_OK")
</pallas_src>

<mosaic_0001>
module attributes {stable_mosaic.version = 11 : i64} {
  func.func @_disc_kernel(%arg0: i32, %arg1: memref<35x128xf32, #tpu.memory_space<vmem>>, %arg2: memref<24x35xf32, #tpu.memory_space<vmem>>, %arg3: memref<24x1xf32, #tpu.memory_space<vmem>>, %arg4: memref<16x24xf32, #tpu.memory_space<vmem>>, %arg5: memref<16x1xf32, #tpu.memory_space<vmem>>, %arg6: memref<4x16xf32, #tpu.memory_space<vmem>>, %arg7: memref<4x1xf32, #tpu.memory_space<vmem>>, %arg8: memref<4x1xf32, #tpu.memory_space<vmem>>, %arg9: memref<1x1xf32, #tpu.memory_space<vmem>>, %arg10: memref<1x128xf32, #tpu.memory_space<vmem>>) attributes {dimension_semantics = [#tpu.dimension_semantics<parallel>], iteration_bounds = array<i64: 1>, scalar_prefetch = 0 : i64, scratch_operands = 0 : i64, tpu.core_type = #tpu.core_type<tc>, window_params = [{transform_indices = @transform_0, window_bounds = array<i64: 35, 128>}, {pipeline_mode = #tpu.pipeline_mode<synchronous>, transform_indices = @transform_1, window_bounds = array<i64: 24, 35>}, {pipeline_mode = #tpu.pipeline_mode<synchronous>, transform_indices = @transform_2, window_bounds = array<i64: 24, 1>}, {pipeline_mode = #tpu.pipeline_mode<synchronous>, transform_indices = @transform_3, window_bounds = array<i64: 16, 24>}, {pipeline_mode = #tpu.pipeline_mode<synchronous>, transform_indices = @transform_4, window_bounds = array<i64: 16, 1>}, {pipeline_mode = #tpu.pipeline_mode<synchronous>, transform_indices = @transform_5, window_bounds = array<i64: 4, 16>}, {pipeline_mode = #tpu.pipeline_mode<synchronous>, transform_indices = @transform_6, window_bounds = array<i64: 4, 1>}, {pipeline_mode = #tpu.pipeline_mode<synchronous>, transform_indices = @transform_7, window_bounds = array<i64: 4, 1>}, {pipeline_mode = #tpu.pipeline_mode<synchronous>, transform_indices = @transform_8, window_bounds = array<i64: 1, 1>}, {transform_indices = @transform_9, window_bounds = array<i64: 1, 128>}]} {
    %c0 = arith.constant 0 : index
    %c0_0 = arith.constant 0 : index
    %0 = vector.load %arg1[%c0, %c0_0] : memref<35x128xf32, #tpu.memory_space<vmem>>, vector<35x128xf32>
    %c0_1 = arith.constant 0 : index
    %c0_2 = arith.constant 0 : index
    %1 = vector.load %arg2[%c0_1, %c0_2] : memref<24x35xf32, #tpu.memory_space<vmem>>, vector<24x35xf32>
    %cst = arith.constant dense<0.000000e+00> : vector<24x128xf32>
    %2 = tpu.matmul %1, %0, %cst {dimension_numbers = #tpu.dot_dimension_numbers<[1], [0], [0], [1], [0, 0, 1, 1], [], []>} : vector<24x35xf32>, vector<35x128xf32>, vector<24x128xf32> -> vector<24x128xf32>
    %c0_3 = arith.constant 0 : index
    %c0_4 = arith.constant 0 : index
    %3 = vector.load %arg3[%c0_3, %c0_4] : memref<24x1xf32, #tpu.memory_space<vmem>>, vector<24x1xf32>
    %4 = vector.broadcast %3 : vector<24x1xf32> to vector<24x128xf32>
    %5 = arith.addf %2, %4 : vector<24x128xf32>
    %6 = math.tanh %5 : vector<24x128xf32>
    %c0_5 = arith.constant 0 : index
    %c0_6 = arith.constant 0 : index
    %7 = vector.load %arg4[%c0_5, %c0_6] : memref<16x24xf32, #tpu.memory_space<vmem>>, vector<16x24xf32>
    %cst_7 = arith.constant dense<0.000000e+00> : vector<16x128xf32>
    %8 = tpu.matmul %7, %6, %cst_7 {dimension_numbers = #tpu.dot_dimension_numbers<[1], [0], [0], [1], [0, 0, 1, 1], [], []>} : vector<16x24xf32>, vector<24x128xf32>, vector<16x128xf32> -> vector<16x128xf32>
    %c0_8 = arith.constant 0 : index
    %c0_9 = arith.constant 0 : index
    %9 = vector.load %arg5[%c0_8, %c0_9] : memref<16x1xf32, #tpu.memory_space<vmem>>, vector<16x1xf32>
    %10 = vector.broadcast %9 : vector<16x1xf32> to vector<16x128xf32>
    %11 = arith.addf %8, %10 : vector<16x128xf32>
    %12 = math.tanh %11 : vector<16x128xf32>
    %c0_10 = arith.constant 0 : index
    %c0_11 = arith.constant 0 : index
    %13 = vector.load %arg6[%c0_10, %c0_11] : memref<4x16xf32, #tpu.memory_space<vmem>>, vector<4x16xf32>
    %cst_12 = arith.constant dense<0.000000e+00> : vector<4x128xf32>
    %14 = tpu.matmul %13, %12, %cst_12 {dimension_numbers = #tpu.dot_dimension_numbers<[1], [0], [0], [1], [0, 0, 1, 1], [], []>} : vector<4x16xf32>, vector<16x128xf32>, vector<4x128xf32> -> vector<4x128xf32>
    %c0_13 = arith.constant 0 : index
    %c0_14 = arith.constant 0 : index
    %15 = vector.load %arg7[%c0_13, %c0_14] : memref<4x1xf32, #tpu.memory_space<vmem>>, vector<4x1xf32>
    %16 = vector.broadcast %15 : vector<4x1xf32> to vector<4x128xf32>
    %17 = arith.addf %14, %16 : vector<4x128xf32>
    %18 = math.tanh %17 : vector<4x128xf32>
    %c0_15 = arith.constant 0 : index
    %c0_16 = arith.constant 0 : index
    %19 = vector.load %arg8[%c0_15, %c0_16] : memref<4x1xf32, #tpu.memory_space<vmem>>, vector<4x1xf32>
    %20 = vector.broadcast %19 : vector<4x1xf32> to vector<4x128xf32>
    %21 = arith.mulf %20, %18 : vector<4x128xf32>
    %cst_17 = arith.constant dense<0.000000e+00> : vector<128xf32>
    %22 = vector.multi_reduction <add>, %21, %cst_17 [0] : vector<4x128xf32> to vector<128xf32>
    %23 = vector.shape_cast %22 : vector<128xf32> to vector<1x128xf32>
    %c0_18 = arith.constant 0 : index
    %c0_19 = arith.constant 0 : index
    %24 = vector.load %arg9[%c0_18, %c0_19] : memref<1x1xf32, #tpu.memory_space<vmem>>, vector<1x1xf32>
    %25 = vector.broadcast %24 : vector<1x1xf32> to vector<1x128xf32>
    %26 = arith.addf %23, %25 : vector<1x128xf32>
    %27 = arith.negf %26 : vector<1x128xf32>
    %28 = math.exp %27 : vector<1x128xf32>
    %cst_20 = arith.constant 1.000000e+00 : f32
    %29 = vector.broadcast %cst_20 : f32 to vector<1x128xf32>
    %30 = arith.addf %29, %28 : vector<1x128xf32>
    %31 = arith.divf %29, %30 : vector<1x128xf32>
    %c0_21 = arith.constant 0 : index
    %c0_22 = arith.constant 0 : index
    %32 = vector.load %arg10[%c0_21, %c0_22] : memref<1x128xf32, #tpu.memory_space<vmem>>, vector<1x128xf32>
    tpu.vector_store %arg10[%c0_21, %c0_22], %31 {strides = array<i32>} : memref<1x128xf32, #tpu.memory_space<vmem>>, vector<1x128xf32>,
    return
  }
  func.func @transform_0(%arg0: i32) -> (i32, i32) {
    %c0_i32 = arith.constant 0 : i32
    %c0_i32_0 = arith.constant 0 : i32
    return %c0_i32, %arg0 : i32, i32
  }
  func.func @transform_1(%arg0: i32) -> (i32, i32) {
    %c0_i32 = arith.constant 0 : i32
    %c0_i32_0 = arith.constant 0 : i32
    %c0_i32_1 = arith.constant 0 : i32
    return %c0_i32, %c0_i32_0 : i32, i32
  }
  func.func @transform_2(%arg0: i32) -> (i32, i32) {
    %c0_i32 = arith.constant 0 : i32
    %c0_i32_0 = arith.constant 0 : i32
    %c0_i32_1 = arith.constant 0 : i32
    return %c0_i32, %c0_i32_0 : i32, i32
  }
  func.func @transform_3(%arg0: i32) -> (i32, i32) {
    %c0_i32 = arith.constant 0 : i32
    %c0_i32_0 = arith.constant 0 : i32
    %c0_i32_1 = arith.constant 0 : i32
    return %c0_i32, %c0_i32_0 : i32, i32
  }
  func.func @transform_4(%arg0: i32) -> (i32, i32) {
    %c0_i32 = arith.constant 0 : i32
    %c0_i32_0 = arith.constant 0 : i32
    %c0_i32_1 = arith.constant 0 : i32
    return %c0_i32, %c0_i32_0 : i32, i32
  }
  func.func @transform_5(%arg0: i32) -> (i32, i32) {
    %c0_i32 = arith.constant 0 : i32
    %c0_i32_0 = arith.constant 0 : i32
    %c0_i32_1 = arith.constant 0 : i32
    return %c0_i32, %c0_i32_0 : i32, i32
  }
  func.func @transform_6(%arg0: i32) -> (i32, i32) {
    %c0_i32 = arith.constant 0 : i32
    %c0_i32_0 = arith.constant 0 : i32
    %c0_i32_1 = arith.constant 0 : i32
    return %c0_i32, %c0_i32_0 : i32, i32
  }
  func.func @transform_7(%arg0: i32) -> (i32, i32) {
    %c0_i32 = arith.constant 0 : i32
    %c0_i32_0 = arith.constant 0 : i32
    %c0_i32_1 = arith.constant 0 : i32
    return %c0_i32, %c0_i32_0 : i32, i32
  }
  func.func @transform_8(%arg0: i32) -> (i32, i32) {
    %c0_i32 = arith.constant 0 : i32
    %c0_i32_0 = arith.constant 0 : i32
    %c0_i32_1 = arith.constant 0 : i32
    return %c0_i32, %c0_i32_0 : i32, i32
  }
  func.func @transform_9(%arg0: i32) -> (i32, i32) {
    %c0_i32 = arith.constant 0 : i32
    %c0_i32_0 = arith.constant 0 : i32
    return %c0_i32, %arg0 : i32, i32
  }
}

</mosaic_0001>

<llo_original>
// kernel: tpu_custom_call.1
$region0: #{tpu_custom_call.1}
  #allocation0 [shape = 'u32[]', space=smem, size = 0x4, offset = 0x4, fixed_abs, tag = 'smem constant byte address 0x4 - core index']
  #allocation1 [shape = 'u32[144,128]{1,0:T(1,128)}', space=vmem, size = 0x12000, scoped, tag = 'internal scratch']
  #allocation2 [shape = 'f32[1,1]{1,0:T(1,128)S(1)}', space=vmem, size = 0x200, scoped, tag = 'scoped memory for tpu_custom_call.1']
  %s0 = inlined_call_operand.vmem [shape: f32[35,128], index: 0, kind: input, shape index: {}]
  %s1 = inlined_call_operand.hbm [shape: f32[24,35], index: 1, kind: input, shape index: {}]
  %s2 = inlined_call_operand.vmem [shape: f32[24,1], index: 2, kind: input, shape index: {}]
  %s3 = inlined_call_operand.vmem [shape: f32[16,24], index: 3, kind: input, shape index: {}]
  %s4 = inlined_call_operand.vmem [shape: f32[16,1], index: 4, kind: input, shape index: {}]
  %s5 = inlined_call_operand.vmem [shape: f32[4,16], index: 5, kind: input, shape index: {}]
  %s6 = inlined_call_operand.vmem [shape: f32[4,1], index: 6, kind: input, shape index: {}]
  %s7 = inlined_call_operand.vmem [shape: f32[4,1], index: 7, kind: input, shape index: {}]
  %s8 = inlined_call_operand.<no memory space> [shape: f32[1,1], index: 8, kind: input, shape index: {}]
  %s9 = inlined_call_operand.hbm [shape: f32[1,128], index: 9, kind: output, shape index: {}]
  %s10 = sld [smem:[#allocation0]]
  $region50: #{tpu_custom_call.1} parent=0
    _
  %s12 = ssub.s32 1, %s10
  %s13 = scalar_select 0, %s12, %s10
  %v14 = vstv %s8
  %15 = vst [vmem:[#allocation2] sm:$0x1] %v14
  $region1: #{tpu_custom_call.1} parent=0
    #allocation3 [shape = 'u8[12288]{0}', space=vmem, size = 0x3000, scoped, tag = 'input window, operand 1, single buffered']
    #allocation4 [shape = 's32[1]{0}', space=sflag, size = 0x4, scoped, tag = 'scoped memory for tpu_custom_call.1']
    #allocation5 [shape = 's32[1]{0}', space=sflag, size = 0x4, scoped, tag = 'scoped memory for tpu_custom_call.1']
    #allocation6 [shape = 'u8[512]{0}', space=vmem, size = 0x400, scoped, tag = 'output window, operand 0, single buffered']
    %16 = vsyncpa [#allocation4], 0
    %17 = vsyncpa [#allocation5], 0
    // Predicated region
    $region2: #{tpu_custom_call.1} parent=1 // pred_check
      _
    $region3: #{tpu_custom_call.1} parent=1 // pred_check_branch
      %19 = sbr.rel (0) target = $region5
    $region4: #{tpu_custom_call.1} parent=1 // pred_region
      _
    $region5: #{tpu_custom_call.1} parent=1 // pred_fallthru
      _
    // Predicated region
    $region6: #{tpu_custom_call.1} parent=1 // pred_check
      _
    $region7: #{tpu_custom_call.1} parent=1 // pred_check_branch
      %21 = sbr.rel (0) target = $region9
    $region8: #{tpu_custom_call.1} parent=1 // pred_region
      %s23 = ssub.s32 384, 384
      %24 = vsyncadd [#allocation4], %s23
      %s25 = sshll.u32 [#allocation3], 4
      %s26 = int_to_ptr.vmem [resolvable:$true] %s25
      %31 = dma.hbm_to_vmem [thread:$0]  %s1, 384, %s26, [#allocation4], 128, 128, 8
    $region9: #{tpu_custom_call.1} parent=1 // pred_fallthru
      _
    // Predicated region
    $region10: #{tpu_custom_call.1} parent=1 // pred_check
      _
    $region11: #{tpu_custom_call.1} parent=1 // pred_check_branch
      %33 = sbr.rel (0) target = $region13
    $region12: #{tpu_custom_call.1} parent=1 // pred_region
      _
    $region13: #{tpu_custom_call.1} parent=1 // pred_fallthru
      _
    // Predicated region
    $region14: #{tpu_custom_call.1} parent=1 // pred_check
      _
    $region15: #{tpu_custom_call.1} parent=1 // pred_check_branch
      %35 = sbr.rel (0) target = $region17
    $region16: #{tpu_custom_call.1} parent=1 // pred_region
      _
    $region17: #{tpu_custom_call.1} parent=1 // pred_fallthru
      _
    // Predicated region
    $region18: #{tpu_custom_call.1} parent=1 // pred_check
      _
    $region19: #{tpu_custom_call.1} parent=1 // pred_check_branch
      %37 = sbr.rel (0) target = $region21
    $region20: #{tpu_custom_call.1} parent=1 // pred_region
      _
    $region21: #{tpu_custom_call.1} parent=1 // pred_fallthru
      _
    // Predicated region
    $region22: #{tpu_custom_call.1} parent=1 // pred_check
      _
    $region23: #{tpu_custom_call.1} parent=1 // pred_check_branch
      %39 = sbr.rel (0) target = $region25
    $region24: #{tpu_custom_call.1} parent=1 // pred_region
      _
    $region25: #{tpu_custom_call.1} parent=1 // pred_fallthru
      _
    // Predicated region
    $region26: #{tpu_custom_call.1} parent=1 // pred_check
      _
    $region27: #{tpu_custom_call.1} parent=1 // pred_check_branch
      %41 = sbr.rel (0) target = $region29
    $region28: #{tpu_custom_call.1} parent=1 // pred_region
      _
    $region29: #{tpu_custom_call.1} parent=1 // pred_fallthru
      _
    // Predicated region
    $region30: #{tpu_custom_call.1} parent=1 // pred_check
      _
    $region31: #{tpu_custom_call.1} parent=1 // pred_check_branch
      %43 = sbr.rel (0) target = $region33
    $region32: #{tpu_custom_call.1} parent=1 // pred_region
      _
    $region33: #{tpu_custom_call.1} parent=1 // pred_fallthru
      _
    // Predicated region
    $region34: #{tpu_custom_call.1} parent=1 // pred_check
      _
    $region35: #{tpu_custom_call.1} parent=1 // pred_check_branch
      %45 = sbr.rel (0) target = $region37
    $region36: #{tpu_custom_call.1} parent=1 // pred_region
      _
    $region37: #{tpu_custom_call.1} parent=1 // pred_fallthru
      _
    // Predicated region
    $region38: #{tpu_custom_call.1} parent=1 // pred_check
      _
    $region39: #{tpu_custom_call.1} parent=1 // pred_check_branch
      %47 = sbr.rel (0) target = $region41
    $region40: #{tpu_custom_call.1} parent=1 // pred_region
      %48 = dma.done [#allocation4], 384
    $region41: #{tpu_custom_call.1} parent=1 // pred_fallthru
      _
    %v49 = vld [vmem:[%s0] sm:$0xff]
    %v50 = vld [vmem:[%s0 + $0x8] sm:$0xff]
    %v51 = vld [vmem:[%s0 + $0x10] sm:$0xff]
    %v52 = vld [vmem:[%s0 + $0x18] sm:$0xff]
    %v53 = vld [vmem:[%s0 + $0x20] sm:$0x7]
    %v54 = vld [vmem:[#allocation3] sm:$0xff]
    %v55 = vld [vmem:[#allocation3 + $0x8] sm:$0xff]
    %v56 = vld [vmem:[#allocation3 + $0x10] sm:$0xff]
    %v57 = vld [vmem:[%s2] sm:$0xff]
    %v58 = vld [vmem:[%s2 + $0x8] sm:$0xff]
    %v59 = vld [vmem:[%s2 + $0x10] sm:$0xff]
    %61 = vset.pattern.permute.xlu0 0
    %62 = vperm.xlu0 %61, %v57
    %v63 = vpop.permute.xlu0 %62
    %66 = vset.pattern.permute.xlu0 0
    %67 = vperm.xlu0 %66, %v58
    %v68 = vpop.permute.xlu0 %67
    %71 = vset.pattern.permute.xlu0 0
    %72 = vperm.xlu0 %71, %v59
    %v73 = vpop.permute.xlu0 %72
    %vm75 = vcmask 285696
    %v77 = vsel %vm75, %v54, 0
    %v80 = vsel %vm75, %v55, 0
    %v83 = vsel %vm75, %v56, 0
    %vm85 = vcmask 1042432
    %v87 = vsel %vm85, %v53, 0
    %89 = vmatprep.subr.mxu0 0.0
    %90 = vmatpush1.msra.mxu0 0.0
    %91 = vmatprep.subr.mxu0 0.0
    %92 = vmatpush1.msra.mxu0 0.0
    %93 = vmatprep.subr.mxu0 0.0
    %94 = vmatpush1.msra.mxu0 0.0
    %95 = vmatprep.subr.mxu0 0.0
    %96 = vmatpush1.msra.mxu0 0.0
    %97 = vmatprep.subr.mxu0 0.0
    %98 = vmatpush1.msra.mxu0 0.0
    %99 = vmatprep.subr.mxu0 0.0
    %100 = vmatpush1.msra.mxu0 0.0
    %101 = vmatprep.subr.mxu0 0.0
    %102 = vmatpush1.msra.mxu0 0.0
    %103 = vmatprep.subr.mxu0 0.0
    %104 = vmatpush1.msra.mxu0 0.0
    %105 = vmatprep.subr.mxu0 0.0
    %106 = vmatpush1.msra.mxu0 0.0
    %107 = vmatprep.subr.mxu0 0.0
    %108 = vmatpush1.msra.mxu0 0.0
    %109 = vmatprep.subr.mxu0 0.0
    %110 = vmatpush1.msra.mxu0 0.0
    %111 = vmatprep.subr.mxu0 0.0
    %112 = vmatpush1.msra.mxu0 %v87
    %113 = vmatprep.subr.mxu0 0.0
    %114 = vmatpush1.msra.mxu0 %v52
    %115 = vmatprep.subr.mxu0 0.0
    %116 = vmatpush1.msra.mxu0 %v51
    %117 = vmatprep.subr.mxu0 0.0
    %118 = vmatpush1.msra.mxu0 %v50
    %119 = vmatprep.subr.mxu0 0.0
    %120 = vmatpush1.msra.mxu0 %v49
    %121 = vmatprep.subr.mxu0 0.0
    %122 = vmatpush2.msra.mxu0 0.0
    %123 = vmatprep.subr.mxu0 0.0
    %124 = vmatpush2.msra.mxu0 0.0
    %125 = vmatprep.subr.mxu0 0.0
    %126 = vmatpush2.msra.mxu0 0.0
    %127 = vmatprep.subr.mxu0 0.0
    %128 = vmatpush2.msra.mxu0 0.0
    %129 = vmatprep.subr.mxu0 0.0
    %130 = vmatpush2.msra.mxu0 0.0
    %131 = vmatprep.subr.mxu0 0.0
    %132 = vmatpush2.msra.mxu0 0.0
    %133 = vmatprep.subr.mxu0 0.0
    %134 = vmatpush2.msra.mxu0 0.0
    %135 = vmatprep.subr.mxu0 0.0
    %136 = vmatpush2.msra.mxu0 0.0
    %137 = vmatprep.subr.mxu0 0.0
    %138 = vmatpush2.msra.mxu0 0.0
    %139 = vmatprep.subr.mxu0 0.0
    %140 = vmatpush2.msra.mxu0 0.0
    %141 = vmatprep.subr.mxu0 0.0
    %142 = vmatpush2.msra.mxu0 0.0
    %143 = vmatprep.subr.mxu0 0.0
    %144 = vmatpush2.msra.mxu0 0.0
    %145 = vmatprep.subr.mxu0 0.0
    %146 = vmatpush2.msra.mxu0 0.0
    %147 = vmatprep.subr.mxu0 0.0
    %148 = vmatpush2.msra.mxu0 0.0
    %149 = vmatprep.subr.mxu0 0.0
    %150 = vmatpush2.msra.mxu0 0.0
    %151 = vmatprep.subr.mxu0 0.0
    %152 = vmatpush2.msra.mxu0 0.0
    %153 = vmatprep.mubr.f32.mxu0 0.0
    %154 = vmatmul.mubr.f32.gmra.mxu0 %v77
    %v155 = vpop.f32.mrf.mxu0
    %v156 = vadd.f32 %v63, %v155
    %v157 = vpop.f32.mrf.mxu0
    %158 = vmatprep.mubr.f32.mxu0 0.0
    %159 = vmatmul.mubr.f32.gmra.mxu0 %v80
    %v160 = vpop.f32.mrf.mxu0
    %v161 = vadd.f32 %v68, %v160
    %v162 = vpop.f32.mrf.mxu0
    %163 = vmatprep.mubr.f32.mxu0 0.0
    %164 = vmatmul.mubr.f32.gmra.mxu0 %v83
    %v165 = vpop.f32.mrf.mxu0
    %v166 = vadd.f32 %v73, %v165
    %v167 = vpop.f32.mrf.mxu0
    %168 = vdwg.mxu0
    %v169 = vtanh.pop %v156
    %v170 = vtanh.pop %v161
    %v171 = vtanh.pop %v166
    %v172 = vld [vmem:[%s3] sm:$0xff]
    %v173 = vld [vmem:[%s3 + $0x8] sm:$0xff]
    %v174 = vld [vmem:[%s4] sm:$0xff]
    %v175 = vld [vmem:[%s4 + $0x8] sm:$0xff]
    %177 = vset.pattern.permute.xlu0 0
    %178 = vperm.xlu0 %177, %v174
    %v179 = vpop.permute.xlu0 %178
    %182 = vset.pattern.permute.xlu0 0
    %183 = vperm.xlu0 %182, %v175
    %v184 = vpop.permute.xlu0 %183
    %vm186 = vcmask 195584
    %v188 = vsel %vm186, %v172, 0
    %v191 = vsel %vm186, %v173, 0
    %193 = vmatprep.subr.mxu0 0.0
    %194 = vmatpush1.msra.mxu0 0.0
    %195 = vmatprep.subr.mxu0 0.0
    %196 = vmatpush1.msra.mxu0 0.0
    %197 = vmatprep.subr.mxu0 0.0
    %198 = vmatpush1.msra.mxu0 0.0
    %199 = vmatprep.subr.mxu0 0.0
    %200 = vmatpush1.msra.mxu0 0.0
    %201 = vmatprep.subr.mxu0 0.0
    %202 = vmatpush1.msra.mxu0 0.0
    %203 = vmatprep.subr.mxu0 0.0
    %204 = vmatpush1.msra.mxu0 0.0
    %205 = vmatprep.subr.mxu0 0.0
    %206 = vmatpush1.msra.mxu0 0.0
    %207 = vmatprep.subr.mxu0 0.0
    %208 = vmatpush1.msra.mxu0 0.0
    %209 = vmatprep.subr.mxu0 0.0
    %210 = vmatpush1.msra.mxu0 0.0
    %211 = vmatprep.subr.mxu0 0.0
    %212 = vmatpush1.msra.mxu0 0.0
    %213 = vmatprep.subr.mxu0 0.0
    %214 = vmatpush1.msra.mxu0 0.0
    %215 = vmatprep.subr.mxu0 0.0
    %216 = vmatpush1.msra.mxu0 0.0
    %217 = vmatprep.subr.mxu0 0.0
    %218 = vmatpush1.msra.mxu0 0.0
    %219 = vmatprep.subr.mxu0 0.0
    %220 = vmatpush1.msra.mxu0 %v171
    %221 = vmatprep.subr.mxu0 0.0
    %222 = vmatpush1.msra.mxu0 %v170
    %223 = vmatprep.subr.mxu0 0.0
    %224 = vmatpush1.msra.mxu0 %v169
    %225 = vmatprep.subr.mxu0 0.0
    %226 = vmatpush2.msra.mxu0 0.0
    %227 = vmatprep.subr.mxu0 0.0
    %228 = vmatpush2.msra.mxu0 0.0
    %229 = vmatprep.subr.mxu0 0.0
    %230 = vmatpush2.msra.mxu0 0.0
    %231 = vmatprep.subr.mxu0 0.0
    %232 = vmatpush2.msra.mxu0 0.0
    %233 = vmatprep.subr.mxu0 0.0
    %234 = vmatpush2.msra.mxu0 0.0
    %235 = vmatprep.subr.mxu0 0.0
    %236 = vmatpush2.msra.mxu0 0.0
    %237 = vmatprep.subr.mxu0 0.0
    %238 = vmatpush2.msra.mxu0 0.0
    %239 = vmatprep.subr.mxu0 0.0
    %240 = vmatpush2.msra.mxu0 0.0
    %241 = vmatprep.subr.mxu0 0.0
    %242 = vmatpush2.msra.mxu0 0.0
    %243 = vmatprep.subr.mxu0 0.0
    %244 = vmatpush2.msra.mxu0 0.0
    %245 = vmatprep.subr.mxu0 0.0
    %246 = vmatpush2.msra.mxu0 0.0
    %247 = vmatprep.subr.mxu0 0.0
    %248 = vmatpush2.msra.mxu0 0.0
    %249 = vmatprep.subr.mxu0 0.0
    %250 = vmatpush2.msra.mxu0 0.0
    %251 = vmatprep.subr.mxu0 0.0
    %252 = vmatpush2.msra.mxu0 0.0
    %253 = vmatprep.subr.mxu0 0.0
    %254 = vmatpush2.msra.mxu0 0.0
    %255 = vmatprep.subr.mxu0 0.0
    %256 = vmatpush2.msra.mxu0 0.0
    %257 = vmatprep.mubr.f32.mxu0 0.0
    %258 = vmatmul.mubr.f32.gmra.mxu0 %v188
    %v259 = vpop.f32.mrf.mxu0
    %v260 = vadd.f32 %v179, %v259
    %v261 = vpop.f32.mrf.mxu0
    %262 = vmatprep.mubr.f32.mxu0 0.0
    %263 = vmatmul.mubr.f32.gmra.mxu0 %v191
    %v264 = vpop.f32.mrf.mxu0
    %v265 = vadd.f32 %v184, %v264
    %v266 = vpop.f32.mrf.mxu0
    %267 = vdwg.mxu0
    %v268 = vtanh.pop %v260
    %v269 = vtanh.pop %v265
    %v270 = vld [vmem:[%s5] sm:$0xf]
    %v271 = vld [vmem:[%s6] sm:$0xf]
    %273 = vset.pattern.permute.xlu0 0
    %274 = vperm.xlu0 %273, %v271
    %v275 = vpop.permute.xlu0 %274
    %vm277 = vcmask 130048
    %v279 = vsel %vm277, %v270, 0
    %281 = vmatprep.subr.mxu0 0.0
    %282 = vmatpush1.msra.mxu0 0.0
    %283 = vmatprep.subr.mxu0 0.0
    %284 = vmatpush1.msra.mxu0 0.0
    %285 = vmatprep.subr.mxu0 0.0
    %286 = vmatpush1.msra.mxu0 0.0
    %287 = vmatprep.subr.mxu0 0.0
    %288 = vmatpush1.msra.mxu0 0.0
    %289 = vmatprep.subr.mxu0 0.0
    %290 = vmatpush1.msra.mxu0 0.0
    %291 = vmatprep.subr.mxu0 0.0
    %292 = vmatpush1.msra.mxu0 0.0
    %293 = vmatprep.subr.mxu0 0.0
    %294 = vmatpush1.msra.mxu0 0.0
    %295 = vmatprep.subr.mxu0 0.0
    %296 = vmatpush1.msra.mxu0 0.0
    %297 = vmatprep.subr.mxu0 0.0
    %298 = vmatpush1.msra.mxu0 0.0
    %299 = vmatprep.subr.mxu0 0.0
    %300 = vmatpush1.msra.mxu0 0.0
    %301 = vmatprep.subr.mxu0 0.0
    %302 = vmatpush1.msra.mxu0 0.0
    %303 = vmatprep.subr.mxu0 0.0
    %304 = vmatpush1.msra.mxu0 0.0
    %305 = vmatprep.subr.mxu0 0.0
    %306 = vmatpush1.msra.mxu0 0.0
    %307 = vmatprep.subr.mxu0 0.0
    %308 = vmatpush1.msra.mxu0 0.0
    %309 = vmatprep.subr.mxu0 0.0
    %310 = vmatpush1.msra.mxu0 %v269
    %311 = vmatprep.subr.mxu0 0.0
    %312 = vmatpush1.msra.mxu0 %v268
    %313 = vmatprep.subr.mxu0 0.0
    %314 = vmatpush2.msra.mxu0 0.0
    %315 = vmatprep.subr.mxu0 0.0
    %316 = vmatpush2.msra.mxu0 0.0
    %317 = vmatprep.subr.mxu0 0.0
    %318 = vmatpush2.msra.mxu0 0.0
    %319 = vmatprep.subr.mxu0 0.0
    %320 = vmatpush2.msra.mxu0 0.0
    %321 = vmatprep.subr.mxu0 0.0
    %322 = vmatpush2.msra.mxu0 0.0
    %323 = vmatprep.subr.mxu0 0.0
    %324 = vmatpush2.msra.mxu0 0.0
    %325 = vmatprep.subr.mxu0 0.0
    %326 = vmatpush2.msra.mxu0 0.0
    %327 = vmatprep.subr.mxu0 0.0
    %328 = vmatpush2.msra.mxu0 0.0
    %329 = vmatprep.subr.mxu0 0.0
    %330 = vmatpush2.msra.mxu0 0.0
    %331 = vmatprep.subr.mxu0 0.0
    %332 = vmatpush2.msra.mxu0 0.0
    %333 = vmatprep.subr.mxu0 0.0
    %334 = vmatpush2.msra.mxu0 0.0
    %335 = vmatprep.subr.mxu0 0.0
    %336 = vmatpush2.msra.mxu0 0.0
    %337 = vmatprep.subr.mxu0 0.0
    %338 = vmatpush2.msra.mxu0 0.0
    %339 = vmatprep.subr.mxu0 0.0
    %340 = vmatpush2.msra.mxu0 0.0
    %341 = vmatprep.subr.mxu0 0.0
    %342 = vmatpush2.msra.mxu0 0.0
    %343 = vmatprep.subr.mxu0 0.0
    %344 = vmatpush2.msra.mxu0 0.0
    %345 = vmatprep.mubr.f32.mxu0 0.0
    %346 = vmatmul.mubr.f32.gmra.mxu0 %v279
    %v347 = vpop.f32.mrf.mxu0
    %v348 = vadd.f32 %v275, %v347
    %v349 = vpop.f32.mrf.mxu0
    %350 = vdwg.mxu0
    %v351 = vtanh.pop %v348
    %v352 = vld [vmem:[%s7] sm:$0xf]
    %354 = vset.pattern.permute.xlu0 0
    %355 = vperm.xlu0 %354, %v352
    %v356 = vpop.permute.xlu0 %355
    %v358 = vmul.f32 %v356, %v351
    %vm359 = vcmask 1043456
    %v360 = vsel %vm359, %v358, 0.0
    %v361 = vrot.slane %v360, 4
    %v362 = vadd.f32 %v360, %v361
    %v363 = vrot.slane %v362, 2
    %v364 = vadd.f32 %v362, %v363
    %v365 = vrot.slane %v364, 1
    %v366 = vadd.f32 %v364, %v365
    %v367 = vld [vmem:[#allocation2] sm:$0x1]
    %369 = vset.pattern.permute.xlu0 0
    %370 = vperm.xlu0 %369, %v367
    %v371 = vpop.permute.xlu0 %370
    %v373 = vlaneseq
    %v374 = vshrl.u32 %v373, 7
    %v375 = vsub.s32 0, %v374
    %v376 = vrot.slane %v371, %v375
    %v377 = vadd.f32 %v366, %v376
    %v378 = vxor.u32 %v377, 2147483648
    %v379 = vmul.f32 %v378, 1.442695
    %v380 = vpow.pop %v379
    %v381 = vadd.f32 %v380, 1.0
    %v382 = vrcp.pop %v381
    %v383 = vmul.f32 1.0, %v382
    %384 = vst [vmem:[#allocation6] sm:$0x1] %v383
    // Predicated region
    $region42: #{tpu_custom_call.1} parent=1 // pred_check
      _
    $region43: #{tpu_custom_call.1} parent=1 // pred_check_branch
      %386 = sbr.rel (0) target = $region45
    $region44: #{tpu_custom_call.1} parent=1 // pred_region
      %s388 = ssub.s32 16, 16
      %389 = vsyncadd [#allocation5], %s388
      %s391 = sshll.u32 [#allocation6], 4
      %s392 = int_to_ptr.vmem [resolvable:$true] %s391
      %394 = dma.vmem_to_hbm [thread:$0]  %s392, 16, %s9, [#allocation5]
    $region45: #{tpu_custom_call.1} parent=1 // pred_fallthru
      _
    // Predicated region
    $region46: #{tpu_custom_call.1} parent=1 // pred_check
      _
    $region47: #{tpu_custom_call.1} parent=1 // pred_check_branch
      %396 = sbr.rel (0) target = $region49
    $region48: #{tpu_custom_call.1} parent=1 // pred_region
      %397 = dma.done [#allocation5], 16
    $region49: #{tpu_custom_call.1} parent=1 // pred_fallthru
      _
    %398 = vsyncpa [#allocation4], 1
    %399 = vsyncpa [#allocation5], 1

</llo_original>
